<compile_context>
chip_gen: v5e
topology: v5e:2x2
jax: 0.10.0
libtpu: 0.0.40
codegen_flags: <defaults>
</compile_context>

<pallas_src>
import functools

import jax
import jax.numpy as jnp
import numpy as np
from jax import lax
from jax.experimental import pallas as pl
from jax.experimental.pallas import tpu as pltpu


def _round_up(x, m):
    return ((x + m - 1) // m) * m


def _fused_embbag_mlp_kernel(
    # scalar-prefetch refs (SMEM)
    text_sref, starts_sref, ends_sref,
    # inputs
    meta_ref, emb_hbm, w1_ref, b1_ref, w2_ref, b2_ref, w3_ref, b3_ref,
    # outputs
    out_ref,
    # scratch
    etok_buf, gsem,
    *, b_tile, chunk, log2_chunk, t_total, n_flight):
    d = etok_buf.shape[1]

    # ---- token range [t_start, t_end) owned by this batch tile (bags are contiguous)
    tile0 = pl.program_id(0) * b_tile
    t_start = starts_sref[tile0]
    t_end = ends_sref[tile0 + b_tile - 1]
    n_tok = t_end - t_start
    n_chunks = lax.shift_right_logical(n_tok + (chunk - 1), jnp.int32(log2_chunk))
    n_gather = n_chunks * chunk      # round up so every row the MXU reads is freshly DMA'd

    # ---- fused embedding gather: HBM row DMAs into VMEM, n_flight copies in flight
    def _wait_slot(slot):
        pltpu.make_async_copy(emb_hbm.at[pl.ds(0, 1)],
                              etok_buf.at[pl.ds(0, 1)],
                              gsem.at[slot]).wait()

    @pl.loop(0, n_gather)
    def _(j):
        slot = j & (n_flight - 1)

        @pl.when(j >= n_flight)
        def _():
            _wait_slot(slot)                         # copy j - n_flight used this slot

        pos = jnp.minimum(t_start + j, t_total - 1)  # clamp: padded columns are masked out
        tok = text_sref[pos]
        pltpu.make_async_copy(emb_hbm.at[pl.ds(tok, 1)],
                              etok_buf.at[pl.ds(j, 1)],
                              gsem.at[slot]).start()

    @pl.loop(0, jnp.minimum(n_gather, n_flight))
    def _(s):
        _wait_slot(s)

    # ---- bag mean: per-chunk membership mask (VPU) x gathered rows (MXU), accumulated
    starts_v = meta_ref[:, 0:1].astype(jnp.int32)                    # hoisted out of loop
    ends_v = meta_ref[:, 1:2].astype(jnp.int32)
    inv_b = jnp.broadcast_to(meta_ref[:, 2:3], (b_tile, chunk))      # hoisted (no CSE in loop)
    base_iota = lax.broadcasted_iota(jnp.int32, (b_tile, chunk), 1)  # hoisted

    def _chunk_body(c, acc):
        off = pl.multiple_of(c * chunk, chunk)
        tok = base_iota + (t_start + off)                            # global token index
        member = (tok >= starts_v) & (tok < ends_v)
        bagmat = jnp.where(member, inv_b, 0.0).astype(etok_buf.dtype)
        rows = etok_buf[pl.ds(off, chunk), :]
        return acc + jnp.dot(bagmat, rows, preferred_element_type=jnp.float32)

    embedded = lax.fori_loop(0, n_chunks, _chunk_body,
                             jnp.zeros((b_tile, d), jnp.float32))

    # ---- MLP (weights already in kernel layout/dtype; only activations are cast)
    cdt = w1_ref.dtype
    h1 = jnp.dot(embedded.astype(cdt), w1_ref[...],
                 preferred_element_type=jnp.float32) + b1_ref[...]
    h1 = jnp.maximum(h1, 0.0)                         # bias/ReLU stay f32 (v5e-friendly)
    h2 = jnp.dot(h1.astype(cdt), w2_ref[...],
                 preferred_element_type=jnp.float32) + b2_ref[...]
    h2 = jnp.maximum(h2, 0.0)
    out_ref[...] = (jnp.dot(h2.astype(cdt), w3_ref[...],
                            preferred_element_type=jnp.float32)
                    + b3_ref[...]).astype(out_ref.dtype)


def text_classification_forward(text, offsets, prepared, *, b_tile=128, n_flight=16):
    """text: int32 [T] flat token ids, offsets: int32 [B] sorted bag start offsets."""
    (emb_p, w1t, b1r, w2t, b2r, w3t, b3r, num_class) = prepared
    t_total = int(text.shape[0])
    batch = int(offsets.shape[0])
    d = emb_p.shape[1]
    c_pad = w3t.shape[1]

    # --- batch tiling: big tiles for MXU row occupancy, but keep grid >= 2 when the
    # batch allows it so the ("parallel",) axis can shard across v7x's 2 TensorCores.
    b_tile_eff = min(b_tile, _round_up(batch, 8))
    if batch > 8 and _round_up(batch, b_tile_eff) // b_tile_eff < 2:
        b_tile_eff = min(b_tile_eff, _round_up((batch + 1) // 2, 8))
    b_pad = _round_up(batch, b_tile_eff)
    grid = (b_pad // b_tile_eff,)

    # --- token chunking: power of two so the in-kernel ceil-div is a shift
    chunk = min(512, max(128, int(pl.next_power_of_2(t_total))))
    log2_chunk = chunk.bit_length() - 1
    t_pad = _round_up(t_total, chunk)

    # --- per-bag metadata (assumes sorted, contiguous bags, last bag ends at T) ---
    text_i = text.astype(jnp.int32)
    offsets_i = offsets.astype(jnp.int32)
    ends = jnp.concatenate([offsets_i[1:], jnp.array([t_total], jnp.int32)])
    counts = (ends - offsets_i).astype(jnp.float32)
    inv = jnp.where(counts > 0, 1.0 / jnp.maximum(counts, 1.0), 0.0)

    pad = b_pad - batch
    starts_p = jnp.pad(offsets_i, (0, pad), constant_values=t_total)   # padded bags empty
    ends_p = jnp.pad(ends, (0, pad), constant_values=t_total)
    inv_p = jnp.pad(inv, (0, pad))

    # single packed, lane-dense per-bag metadata block (1 DMA per tile instead of 3):
    # col 0 = start, col 1 = end, col 2 = 1/len (ints exact in f32 up to 2^24 tokens)
    meta = jnp.zeros((b_pad, 128), jnp.float32)
    meta = meta.at[:, 0].set(starts_p.astype(jnp.float32))
    meta = meta.at[:, 1].set(ends_p.astype(jnp.float32))
    meta = meta.at[:, 2].set(inv_p)

    def tile_map(i, text_ref, starts_ref, ends_ref):
        return (i, 0)

    def const_map(i, text_ref, starts_ref, ends_ref):
        return (0, 0)

    const = lambda shape: pl.BlockSpec(shape, const_map)
    # NOTE: the large token buffer is a kernel scratch (single-buffered by
    # construction); the remaining resident inputs are a few tens of KiB of weights,
    # so no pipeline_mode override is needed to stay within scoped VMEM.

    kernel = functools.partial(
        _fused_embbag_mlp_kernel,
        b_tile=b_tile_eff, chunk=chunk, log2_chunk=log2_chunk,
        t_total=t_total, n_flight=n_flight)

    h1p, h2p = w1t.shape[1], w2t.shape[1]
    flops = 2 * b_pad * (t_pad * d + d * h1p + h1p * h2p + h2p * c_pad)
    bytes_accessed = (text_i.size * 4 + starts_p.size * 8 + meta.size * 4
                      + grid[0] * t_pad * d * emb_p.dtype.itemsize
                      + (w1t.size + w2t.size + w3t.size) * w1t.dtype.itemsize
                      + (b1r.size + b2r.size + b3r.size) * 4
                      + b_pad * c_pad * 4)

    out = pl.pallas_call(
        kernel,
        out_shape=jax.ShapeDtypeStruct((b_pad, c_pad), jnp.float32),
        grid_spec=pltpu.PrefetchScalarGridSpec(
            num_scalar_prefetch=3,                       # text, bag starts, bag ends
            grid=grid,
            in_specs=[
                pl.BlockSpec((b_tile_eff, 128), tile_map),   # packed per-bag metadata
                pl.BlockSpec(memory_space=pl.ANY),           # embedding table stays in HBM
                const(w1t.shape), const(b1r.shape),
                const(w2t.shape), const(b2r.shape),
                const(w3t.shape), const(b3r.shape),
            ],
            out_specs=pl.BlockSpec((b_tile_eff, c_pad), tile_map),
            scratch_shapes=[
                pltpu.VMEM((t_pad, d), emb_p.dtype),         # gathered token rows
                pltpu.SemaphoreType.DMA((n_flight,)),        # gather DMA slots
            ]),
        compiler_params=pltpu.CompilerParams(
            dimension_semantics=("parallel",),
            vmem_limit_bytes=32 * 1024 * 1024),
        cost_estimate=pl.CostEstimate(flops=int(flops), transcendentals=0,
                                      bytes_accessed=int(bytes_accessed)),
    )(text_i, starts_p, ends_p, meta, emb_p, w1t, b1r, w2t, b2r, w3t, b3r)

    return out[:batch, :num_class]


def init_params(key, vocab_size, embed_dim, num_class):
    """PyTorch-layout parameters (Linear weights stored [out, in])."""
    initrange = 0.5
    k_emb, k1, k2, k3 = jax.random.split(key, 4)
    emb_w = jax.random.uniform(k_emb, (vocab_size, embed_dim), jnp.float32,
                               -initrange, initrange)
    w1 = jax.random.uniform(k1, (64, embed_dim), jnp.float32, -initrange, initrange)
    b1 = jnp.zeros((64,), jnp.float32)
    w2 = jax.random.uniform(k2, (16, 64), jnp.float32, -initrange, initrange)
    b2 = jnp.zeros((16,), jnp.float32)
    w3 = jax.random.uniform(k3, (num_class, 16), jnp.float32, -initrange, initrange)
    b3 = jnp.zeros((num_class,), jnp.float32)
    return (emb_w, w1, b1, w2, b2, w3, b3)


def prepare_params(params, compute_dtype=jnp.float32):
    """One-time conversion to kernel layout: transpose fc weights, reshape biases to
    [1, N], zero-pad all fc output/input widths to lane-dense multiples of 128 (exact),
    and optionally cast the MXU operands (weights + embedding table) to bf16 once."""
    emb_w, w1, b1, w2, b2, w3, b3 = params
    num_class = w3.shape[0]
    d = emb_w.shape[1]
    h1, h2 = w1.shape[0], w2.shape[0]
    h1p, h2p, cp = _round_up(h1, 128), _round_up(h2, 128), _round_up(num_class, 128)

    w1t = jnp.zeros((d, h1p), jnp.float32).at[:, :h1].set(w1.T)
    b1r = jnp.zeros((1, h1p), jnp.float32).at[:, :h1].set(b1[None, :])
    w2t = jnp.zeros((h1p, h2p), jnp.float32).at[:h1, :h2].set(w2.T)
    b2r = jnp.zeros((1, h2p), jnp.float32).at[:, :h2].set(b2[None, :])
    w3t = jnp.zeros((h2p, cp), jnp.float32).at[:h2, :num_class].set(w3.T)
    b3r = jnp.zeros((1, cp), jnp.float32).at[:, :num_class].set(b3[None, :])

    emb_p = emb_w.astype(compute_dtype)
    w1t, w2t, w3t = (w.astype(compute_dtype) for w in (w1t, w2t, w3t))
    # biases stay f32 (added after the f32-accumulating dots)
    return (emb_p, w1t, b1r, w2t, b2r, w3t, b3r, num_class)


def reference_forward(text, offsets, params):
    """Pure-JAX reference of the PyTorch forward (EmbeddingBag mean + MLP)."""
    emb_w, w1, b1, w2, b2, w3, b3 = params
    T = text.shape[0]
    B = offsets.shape[0]
    etok = emb_w[text]
    bag_ends = jnp.concatenate([offsets[1:], jnp.array([T], jnp.int32)])
    outs = []
    for b in range(B):
        s, e = int(offsets[b]), int(bag_ends[b])
        seg = etok[s:e]
        mean = jnp.mean(seg, axis=0) if e > s else jnp.zeros(etok.shape[1])
        outs.append(mean)
    embedded = jnp.stack(outs)
    h1 = jnp.maximum(embedded @ w1.T + b1, 0.0)
    h2 = jnp.maximum(h1 @ w2.T + b2, 0.0)
    return h2 @ w3.T + b3


if __name__ == "__main__":
    vocab_size, embed_dim, num_class = 100, 32, 4
    B, T = 8, 64

    key = jax.random.PRNGKey(0)
    k_params, k_text = jax.random.split(key)
    params = init_params(k_params, vocab_size, embed_dim, num_class)
    prepared = prepare_params(params)   # one-time layout (f32 so the 1e-5 check holds)

    text = jax.random.randint(k_text, (T,), 0, vocab_size, dtype=jnp.int32)
    offsets = jnp.array([0, 5, 13, 20, 30, 38, 50, 57], dtype=jnp.int32)  # [B]

    fwd = jax.jit(lambda tt, oo: text_classification_forward(tt, oo, prepared))
    out = fwd(text, offsets)
    out = jax.block_until_ready(out)

    ref = reference_forward(text, offsets, params)
    np.testing.assert_allclose(np.asarray(out), np.asarray(ref), rtol=1e-5, atol=1e-5)

    print("KERNEL_OK")
</pallas_src>

<mosaic_0001>
module attributes {stable_mosaic.version = 11 : i64} {
  func.func @_fused_embbag_mlp_kernel(%arg0: i32, %arg1: memref<64xi32, #tpu.memory_space<smem>>, %arg2: memref<8xi32, #tpu.memory_space<smem>>, %arg3: memref<8xi32, #tpu.memory_space<smem>>, %arg4: memref<8x128xf32, #tpu.memory_space<vmem>>, %arg5: memref<100x32xf32, #tpu.memory_space<any>>, %arg6: memref<32x128xf32, #tpu.memory_space<vmem>>, %arg7: memref<1x128xf32, #tpu.memory_space<vmem>>, %arg8: memref<128x128xf32, #tpu.memory_space<vmem>>, %arg9: memref<1x128xf32, #tpu.memory_space<vmem>>, %arg10: memref<128x128xf32, #tpu.memory_space<vmem>>, %arg11: memref<1x128xf32, #tpu.memory_space<vmem>>, %arg12: memref<8x128xf32, #tpu.memory_space<vmem>>, %arg13: memref<128x32xf32, #tpu.memory_space<vmem>>, %arg14: memref<16x!tpu.dma_semaphore, #tpu.memory_space<semaphore_mem>>) attributes {dimension_semantics = [#tpu.dimension_semantics<parallel>], iteration_bounds = array<i64: 1>, scalar_prefetch = 3 : i64, scratch_operands = 2 : i64, tpu.core_type = #tpu.core_type<tc>, window_params = [{transform_indices = @transform_0, window_bounds = array<i64: 8, 128>}, {}, {pipeline_mode = #tpu.pipeline_mode<synchronous>, transform_indices = @transform_2, window_bounds = array<i64: 32, 128>}, {pipeline_mode = #tpu.pipeline_mode<synchronous>, transform_indices = @transform_3, window_bounds = array<i64: 1, 128>}, {pipeline_mode = #tpu.pipeline_mode<synchronous>, transform_indices = @transform_4, window_bounds = array<i64: 128, 128>}, {pipeline_mode = #tpu.pipeline_mode<synchronous>, transform_indices = @transform_5, window_bounds = array<i64: 1, 128>}, {pipeline_mode = #tpu.pipeline_mode<synchronous>, transform_indices = @transform_6, window_bounds = array<i64: 128, 128>}, {pipeline_mode = #tpu.pipeline_mode<synchronous>, transform_indices = @transform_7, window_bounds = array<i64: 1, 128>}, {transform_indices = @transform_8, window_bounds = array<i64: 8, 128>}]} {
    %c8_i32 = arith.constant 8 : i32
    %0 = arith.muli %arg0, %c8_i32 : i32
    %1 = arith.index_cast %0 : i32 to index
    %2 = memref.load %arg2[%1] : memref<8xi32, #tpu.memory_space<smem>>
    %c8_i32_0 = arith.constant 8 : i32
    %3 = arith.addi %0, %c8_i32_0 : i32
    %c1_i32 = arith.constant 1 : i32
    %4 = arith.subi %3, %c1_i32 : i32
    %5 = arith.index_cast %4 : i32 to index
    %6 = memref.load %arg3[%5] : memref<8xi32, #tpu.memory_space<smem>>
    %7 = arith.subi %6, %2 : i32
    %c127_i32 = arith.constant 127 : i32
    %8 = arith.addi %7, %c127_i32 : i32
    %c7_i32 = arith.constant 7 : i32
    %9 = arith.shrui %8, %c7_i32 : i32
    %c128_i32 = arith.constant 128 : i32
    %10 = arith.muli %9, %c128_i32 : i32
    %c0_i32 = arith.constant 0 : i32
    %11 = arith.subi %10, %c0_i32 : i32
    %c1_i32_1 = arith.constant 1 : i32
    %c1_i32_2 = arith.constant 1 : i32
    %12 = arith.subi %c1_i32_1, %c1_i32_2 : i32
    %13 = arith.addi %11, %12 : i32
    %c1_i32_3 = arith.constant 1 : i32
    %14 = arith.divsi %13, %c1_i32_3 : i32
    %c1_i32_4 = arith.constant 1 : i32
    %c0_i32_5 = arith.constant 0 : i32
    %c0_i32_6 = arith.constant 0 : i32
    %15 = arith.subi %14, %c0_i32_6 : i32
    %16 = arith.addi %c0_i32_6, %15 : i32
    %c1_i32_7 = arith.constant 1 : i32
    scf.for %arg15 = %c0_i32_6 to %16 step %c1_i32_7  : i32 {
      %56 = arith.muli %arg15, %c1_i32_4 : i32
      %57 = arith.addi %c0_i32_5, %56 : i32
      %c15_i32 = arith.constant 15 : i32
      %58 = arith.andi %57, %c15_i32 : i32
      %c16_i32_40 = arith.constant 16 : i32
      %59 = arith.cmpi sge, %57, %c16_i32_40 : i32
      %60 = arith.extui %59 : i1 to i32
      %c0_i32_41 = arith.constant 0 : i32
      %61 = arith.cmpi ne, %60, %c0_i32_41 : i32
      scf.if %61 {
        %c0_i32_44 = arith.constant 0 : i32
        %c0_i32_45 = arith.constant 0 : i32
        %70 = tpu.memref_slice %arg5[%c0_i32_44, %c0_i32_45] : memref<100x32xf32, #tpu.memory_space<any>> -> memref<1x32xf32, #tpu.memory_space<any>>
        %c0_i32_46 = arith.constant 0 : i32
        %c0_i32_47 = arith.constant 0 : i32
        %71 = tpu.memref_slice %arg13[%c0_i32_46, %c0_i32_47] : memref<128x32xf32, #tpu.memory_space<vmem>> -> memref<1x32xf32, #tpu.memory_space<vmem>>
        %72 = tpu.memref_slice %arg14[%58] : memref<16x!tpu.dma_semaphore, #tpu.memory_space<semaphore_mem>> -> memref<1x!tpu.dma_semaphore, #tpu.memory_space<semaphore_mem>>
        %73 = tpu.memref_squeeze %72 : memref<1x!tpu.dma_semaphore, #tpu.memory_space<semaphore_mem>> -> memref<!tpu.dma_semaphore, #tpu.memory_space<semaphore_mem>>
        tpu.wait_dma2 semaphore(%73 : memref<!tpu.dma_semaphore, #tpu.memory_space<semaphore_mem>>) src(%70 : memref<1x32xf32, #tpu.memory_space<any>>) dst(%71 : memref<1x32xf32, #tpu.memory_space<vmem>>)
      } else {
      }
      %62 = arith.addi %2, %57 : i32
      %c63_i32 = arith.constant 63 : i32
      %63 = arith.minsi %62, %c63_i32 : i32
      %64 = arith.index_cast %63 : i32 to index
      %65 = memref.load %arg1[%64] : memref<64xi32, #tpu.memory_space<smem>>
      %c0_i32_42 = arith.constant 0 : i32
      %66 = tpu.memref_slice %arg5[%65, %c0_i32_42] : memref<100x32xf32, #tpu.memory_space<any>> -> memref<1x32xf32, #tpu.memory_space<any>>
      %c0_i32_43 = arith.constant 0 : i32
      %67 = tpu.memref_slice %arg13[%57, %c0_i32_43] : memref<128x32xf32, #tpu.memory_space<vmem>> -> memref<1x32xf32, #tpu.memory_space<vmem>>
      %68 = tpu.memref_slice %arg14[%58] : memref<16x!tpu.dma_semaphore, #tpu.memory_space<semaphore_mem>> -> memref<1x!tpu.dma_semaphore, #tpu.memory_space<semaphore_mem>>
      %69 = tpu.memref_squeeze %68 : memref<1x!tpu.dma_semaphore, #tpu.memory_space<semaphore_mem>> -> memref<!tpu.dma_semaphore, #tpu.memory_space<semaphore_mem>>
      tpu.enqueue_dma source(%66 : memref<1x32xf32, #tpu.memory_space<any>>) target(%67 : memref<1x32xf32, #tpu.memory_space<vmem>>) target_semaphore(%69 : memref<!tpu.dma_semaphore, #tpu.memory_space<semaphore_mem>>)
    }
    %c16_i32 = arith.constant 16 : i32
    %17 = arith.minsi %10, %c16_i32 : i32
    %c0_i32_8 = arith.constant 0 : i32
    %18 = arith.subi %17, %c0_i32_8 : i32
    %c1_i32_9 = arith.constant 1 : i32
    %c1_i32_10 = arith.constant 1 : i32
    %19 = arith.subi %c1_i32_9, %c1_i32_10 : i32
    %20 = arith.addi %18, %19 : i32
    %c1_i32_11 = arith.constant 1 : i32
    %21 = arith.divsi %20, %c1_i32_11 : i32
    %c1_i32_12 = arith.constant 1 : i32
    %c0_i32_13 = arith.constant 0 : i32
    %c0_i32_14 = arith.constant 0 : i32
    %22 = arith.subi %21, %c0_i32_14 : i32
    %23 = arith.addi %c0_i32_14, %22 : i32
    %c1_i32_15 = arith.constant 1 : i32
    scf.for %arg15 = %c0_i32_14 to %23 step %c1_i32_15  : i32 {
      %56 = arith.muli %arg15, %c1_i32_12 : i32
      %57 = arith.addi %c0_i32_13, %56 : i32
      %c0_i32_40 = arith.constant 0 : i32
      %c0_i32_41 = arith.constant 0 : i32
      %58 = tpu.memref_slice %arg5[%c0_i32_40, %c0_i32_41] : memref<100x32xf32, #tpu.memory_space<any>> -> memref<1x32xf32, #tpu.memory_space<any>>
      %c0_i32_42 = arith.constant 0 : i32
      %c0_i32_43 = arith.constant 0 : i32
      %59 = tpu.memref_slice %arg13[%c0_i32_42, %c0_i32_43] : memref<128x32xf32, #tpu.memory_space<vmem>> -> memref<1x32xf32, #tpu.memory_space<vmem>>
      %60 = tpu.memref_slice %arg14[%57] : memref<16x!tpu.dma_semaphore, #tpu.memory_space<semaphore_mem>> -> memref<1x!tpu.dma_semaphore, #tpu.memory_space<semaphore_mem>>
      %61 = tpu.memref_squeeze %60 : memref<1x!tpu.dma_semaphore, #tpu.memory_space<semaphore_mem>> -> memref<!tpu.dma_semaphore, #tpu.memory_space<semaphore_mem>>
      tpu.wait_dma2 semaphore(%61 : memref<!tpu.dma_semaphore, #tpu.memory_space<semaphore_mem>>) src(%58 : memref<1x32xf32, #tpu.memory_space<any>>) dst(%59 : memref<1x32xf32, #tpu.memory_space<vmem>>)
    }
    %c0 = arith.constant 0 : index
    %c0_16 = arith.constant 0 : index
    %24 = vector.load %arg4[%c0, %c0_16] : memref<8x128xf32, #tpu.memory_space<vmem>>, vector<8x1xf32>
    %25 = arith.fptosi %24 : vector<8x1xf32> to vector<8x1xi32>
    %c0_17 = arith.constant 0 : index
    %c1 = arith.constant 1 : index
    %26 = vector.load %arg4[%c0_17, %c1] : memref<8x128xf32, #tpu.memory_space<vmem>>, vector<8x1xf32>
    %27 = arith.fptosi %26 : vector<8x1xf32> to vector<8x1xi32>
    %c0_18 = arith.constant 0 : index
    %c2 = arith.constant 2 : index
    %28 = vector.load %arg4[%c0_18, %c2] : memref<8x128xf32, #tpu.memory_space<vmem>>, vector<8x1xf32>
    %29 = vector.shape_cast %28 : vector<8x1xf32> to vector<8x1xf32>
    %30 = vector.broadcast %29 : vector<8x1xf32> to vector<8x128xf32>
    %31 = tpu.iota {dimensions = array<i32: 1>} : vector<8x128xi32>
    %cst = arith.constant 0.000000e+00 : f32
    %32 = vector.broadcast %cst : f32 to vector<8x32xf32>
    %c0_i32_19 = arith.constant 0 : i32
    %33 = arith.subi %9, %c0_i32_19 : i32
    %34 = arith.addi %c0_i32_19, %33 : i32
    %c1_i32_20 = arith.constant 1 : i32
    %35 = scf.for %arg15 = %c0_i32_19 to %34 step %c1_i32_20 iter_args(%arg16 = %32) -> (vector<8x32xf32>)  : i32 {
      %c128_i32_40 = arith.constant 128 : i32
      %56 = arith.muli %arg15, %c128_i32_40 : i32
      %57 = tpu.assume_multiple %56, 128 : i32
      %58 = arith.addi %2, %57 : i32
      %59 = vector.broadcast %58 : i32 to vector<8x128xi32>
      %60 = arith.addi %31, %59 : vector<8x128xi32>
      %61 = vector.broadcast %25 : vector<8x1xi32> to vector<8x128xi32>
      %62 = arith.cmpi sge, %60, %61 : vector<8x128xi32>
      %63 = vector.broadcast %27 : vector<8x1xi32> to vector<8x128xi32>
      %64 = arith.cmpi slt, %60, %63 : vector<8x128xi32>
      %65 = arith.andi %62, %64 : vector<8x128xi1>
      %cst_41 = arith.constant 0.000000e+00 : f32
      %66 = vector.broadcast %cst_41 : f32 to vector<8x128xf32>
      %67 = arith.select %65, %30, %66 : vector<8x128xi1>, vector<8x128xf32>
      %68 = arith.index_cast %57 : i32 to index
      %c0_42 = arith.constant 0 : index
      %69 = vector.load %arg13[%68, %c0_42] : memref<128x32xf32, #tpu.memory_space<vmem>>, vector<128x32xf32>
      %cst_43 = arith.constant dense<0.000000e+00> : vector<8x32xf32>
      %70 = tpu.matmul %67, %69, %cst_43 {dimension_numbers = #tpu.dot_dimension_numbers<[1], [0], [0], [1], [0, 0, 1, 1], [], []>} : vector<8x128xf32>, vector<128x32xf32>, vector<8x32xf32> -> vector<8x32xf32>
      %71 = arith.addf %arg16, %70 : vector<8x32xf32>
      scf.yield %71 : vector<8x32xf32>
    }
    %c0_21 = arith.constant 0 : index
    %c0_22 = arith.constant 0 : index
    %36 = vector.load %arg6[%c0_21, %c0_22] : memref<32x128xf32, #tpu.memory_space<vmem>>, vector<32x128xf32>
    %cst_23 = arith.constant dense<0.000000e+00> : vector<8x128xf32>
    %37 = tpu.matmul %35, %36, %cst_23 {dimension_numbers = #tpu.dot_dimension_numbers<[1], [0], [0], [1], [0, 0, 1, 1], [], []>} : vector<8x32xf32>, vector<32x128xf32>, vector<8x128xf32> -> vector<8x128xf32>
    %c0_24 = arith.constant 0 : index
    %c0_25 = arith.constant 0 : index
    %38 = vector.load %arg7[%c0_24, %c0_25] : memref<1x128xf32, #tpu.memory_space<vmem>>, vector<1x128xf32>
    %39 = vector.broadcast %38 : vector<1x128xf32> to vector<8x128xf32>
    %40 = arith.addf %37, %39 : vector<8x128xf32>
    %cst_26 = arith.constant 0.000000e+00 : f32
    %41 = vector.broadcast %cst_26 : f32 to vector<8x128xf32>
    %42 = arith.maximumf %40, %41 : vector<8x128xf32>
    %c0_27 = arith.constant 0 : index
    %c0_28 = arith.constant 0 : index
    %43 = vector.load %arg8[%c0_27, %c0_28] : memref<128x128xf32, #tpu.memory_space<vmem>>, vector<128x128xf32>
    %cst_29 = arith.constant dense<0.000000e+00> : vector<8x128xf32>
    %44 = tpu.matmul %42, %43, %cst_29 {dimension_numbers = #tpu.dot_dimension_numbers<[1], [0], [0], [1], [0, 0, 1, 1], [], []>} : vector<8x128xf32>, vector<128x128xf32>, vector<8x128xf32> -> vector<8x128xf32>
    %c0_30 = arith.constant 0 : index
    %c0_31 = arith.constant 0 : index
    %45 = vector.load %arg9[%c0_30, %c0_31] : memref<1x128xf32, #tpu.memory_space<vmem>>, vector<1x128xf32>
    %46 = vector.broadcast %45 : vector<1x128xf32> to vector<8x128xf32>
    %47 = arith.addf %44, %46 : vector<8x128xf32>
    %cst_32 = arith.constant 0.000000e+00 : f32
    %48 = vector.broadcast %cst_32 : f32 to vector<8x128xf32>
    %49 = arith.maximumf %47, %48 : vector<8x128xf32>
    %c0_33 = arith.constant 0 : index
    %c0_34 = arith.constant 0 : index
    %50 = vector.load %arg10[%c0_33, %c0_34] : memref<128x128xf32, #tpu.memory_space<vmem>>, vector<128x128xf32>
    %cst_35 = arith.constant dense<0.000000e+00> : vector<8x128xf32>
    %51 = tpu.matmul %49, %50, %cst_35 {dimension_numbers = #tpu.dot_dimension_numbers<[1], [0], [0], [1], [0, 0, 1, 1], [], []>} : vector<8x128xf32>, vector<128x128xf32>, vector<8x128xf32> -> vector<8x128xf32>
    %c0_36 = arith.constant 0 : index
    %c0_37 = arith.constant 0 : index
    %52 = vector.load %arg11[%c0_36, %c0_37] : memref<1x128xf32, #tpu.memory_space<vmem>>, vector<1x128xf32>
    %53 = vector.broadcast %52 : vector<1x128xf32> to vector<8x128xf32>
    %54 = arith.addf %51, %53 : vector<8x128xf32>
    %c0_38 = arith.constant 0 : index
    %c0_39 = arith.constant 0 : index
    %55 = vector.load %arg12[%c0_38, %c0_39] : memref<8x128xf32, #tpu.memory_space<vmem>>, vector<8x128xf32>
    tpu.vector_store %arg12[%c0_38, %c0_39], %54 {strides = array<i32>} : memref<8x128xf32, #tpu.memory_space<vmem>>, vector<8x128xf32>,
    return
  }
  func.func @transform_0(%arg0: i32, %arg1: memref<64xi32, #tpu.memory_space<smem>>, %arg2: memref<8xi32, #tpu.memory_space<smem>>, %arg3: memref<8xi32, #tpu.memory_space<smem>>) -> (i32, i32) {
    %c0_i32 = arith.constant 0 : i32
    %c0_i32_0 = arith.constant 0 : i32
    return %arg0, %c0_i32 : i32, i32
  }
  func.func @transform_2(%arg0: i32, %arg1: memref<64xi32, #tpu.memory_space<smem>>, %arg2: memref<8xi32, #tpu.memory_space<smem>>, %arg3: memref<8xi32, #tpu.memory_space<smem>>) -> (i32, i32) {
    %c0_i32 = arith.constant 0 : i32
    %c0_i32_0 = arith.constant 0 : i32
    %c0_i32_1 = arith.constant 0 : i32
    return %c0_i32, %c0_i32_0 : i32, i32
  }
  func.func @transform_3(%arg0: i32, %arg1: memref<64xi32, #tpu.memory_space<smem>>, %arg2: memref<8xi32, #tpu.memory_space<smem>>, %arg3: memref<8xi32, #tpu.memory_space<smem>>) -> (i32, i32) {
    %c0_i32 = arith.constant 0 : i32
    %c0_i32_0 = arith.constant 0 : i32
    %c0_i32_1 = arith.constant 0 : i32
    return %c0_i32, %c0_i32_0 : i32, i32
  }
  func.func @transform_4(%arg0: i32, %arg1: memref<64xi32, #tpu.memory_space<smem>>, %arg2: memref<8xi32, #tpu.memory_space<smem>>, %arg3: memref<8xi32, #tpu.memory_space<smem>>) -> (i32, i32) {
    %c0_i32 = arith.constant 0 : i32
    %c0_i32_0 = arith.constant 0 : i32
    %c0_i32_1 = arith.constant 0 : i32
    return %c0_i32, %c0_i32_0 : i32, i32
  }
  func.func @transform_5(%arg0: i32, %arg1: memref<64xi32, #tpu.memory_space<smem>>, %arg2: memref<8xi32, #tpu.memory_space<smem>>, %arg3: memref<8xi32, #tpu.memory_space<smem>>) -> (i32, i32) {
    %c0_i32 = arith.constant 0 : i32
    %c0_i32_0 = arith.constant 0 : i32
    %c0_i32_1 = arith.constant 0 : i32
    return %c0_i32, %c0_i32_0 : i32, i32
  }
  func.func @transform_6(%arg0: i32, %arg1: memref<64xi32, #tpu.memory_space<smem>>, %arg2: memref<8xi32, #tpu.memory_space<smem>>, %arg3: memref<8xi32, #tpu.memory_space<smem>>) -> (i32, i32) {
    %c0_i32 = arith.constant 0 : i32
    %c0_i32_0 = arith.constant 0 : i32
    %c0_i32_1 = arith.constant 0 : i32
    return %c0_i32, %c0_i32_0 : i32, i32
  }
  func.func @transform_7(%arg0: i32, %arg1: memref<64xi32, #tpu.memory_space<smem>>, %arg2: memref<8xi32, #tpu.memory_space<smem>>, %arg3: memref<8xi32, #tpu.memory_space<smem>>) -> (i32, i32) {
    %c0_i32 = arith.constant 0 : i32
    %c0_i32_0 = arith.constant 0 : i32
    %c0_i32_1 = arith.constant 0 : i32
    return %c0_i32, %c0_i32_0 : i32, i32
  }
  func.func @transform_8(%arg0: i32, %arg1: memref<64xi32, #tpu.memory_space<smem>>, %arg2: memref<8xi32, #tpu.memory_space<smem>>, %arg3: memref<8xi32, #tpu.memory_space<smem>>) -> (i32, i32) {
    %c0_i32 = arith.constant 0 : i32
    %c0_i32_0 = arith.constant 0 : i32
    return %arg0, %c0_i32 : i32, i32
  }
}

</mosaic_0001>

<llo_original>
// kernel: _lambda_.1
$region0: #{_lambda_.1}
  #allocation0 [shape = 'u32[]', space=smem, size = 0x4, offset = 0x4, fixed_abs, tag = 'smem constant byte address 0x4 - core index']
  #allocation1 [shape = 'u32[72,128]{1,0:T(1,128)}', space=vmem, size = 0x9000, scoped, tag = 'internal scratch']
  #allocation2 [shape = 'f32[128,32]{1,0:T(8,128)}', space=vmem, size = 0x10000, scoped, tag = 'scratch operand']
  #allocation3 [shape = 's32[16]{0}', space=sflag, size = 0x40, scoped, tag = 'scratch operand']
  #allocation4 [shape = 's32[1]{0}', space=sflag, size = 0x4, scoped, tag = 'scoped memory for _lambda_.1']
  #allocation5 [shape = 'u8[512]{0}', space=smem, size = 0x200, scoped, tag = 'prefetched SMEM operand 0']
  #allocation6 [shape = 'u8[512]{0}', space=smem, size = 0x200, scoped, tag = 'prefetched SMEM operand 1']
  #allocation7 [shape = 'u8[512]{0}', space=smem, size = 0x200, scoped, tag = 'prefetched SMEM operand 2']
  #allocation12 [shape = 's32[]', space=sflag, size = 0x4, offset = 0, fixed_abs, tag = 'sflag constant byte address 0x0 - dummy sync flag']
  #allocation13 [shape = 's32[]', space=sflag, size = 0x4, offset = 0, fixed_abs, tag = 'sflag constant byte address 0x0 - dummy sync flag']
  #allocation14 [shape = 'u32[]', space=smem, size = 0x4, offset = 0x44, fixed_abs, tag = 'smem constant byte address 0x44 - assertion arg 0']
  #allocation15 [shape = 'u32[]', space=smem, size = 0x4, offset = 0x48, fixed_abs, tag = 'smem constant byte address 0x48 - assertion arg 1']
  %s0 = inlined_call_operand.vmem [shape: s32[64], index: 0, kind: input, shape index: {}]
  %s1 = inlined_call_operand.vmem [shape: s32[8], index: 1, kind: input, shape index: {}]
  %s2 = inlined_call_operand.vmem [shape: s32[8], index: 2, kind: input, shape index: {}]
  %s3 = inlined_call_operand.vmem [shape: f32[8,128], index: 3, kind: input, shape index: {}]
  %s4 = inlined_call_operand.hbm [shape: f32[100,32], index: 4, kind: input, shape index: {}]
  %s5 = inlined_call_operand.hbm [shape: f32[32,128], index: 5, kind: input, shape index: {}]
  %s6 = inlined_call_operand.vmem [shape: f32[1,128], index: 6, kind: input, shape index: {}, may-alias: {6,8,10}]
  %s7 = inlined_call_operand.vmem [shape: f32[128,128], index: 7, kind: input, shape index: {}]
  %s8 = inlined_call_operand.vmem [shape: f32[1,128], index: 8, kind: input, shape index: {}, may-alias: {6,8,10}]
  %s9 = inlined_call_operand.hbm [shape: f32[128,128], index: 9, kind: input, shape index: {}]
  %s10 = inlined_call_operand.vmem [shape: f32[1,128], index: 10, kind: input, shape index: {}, may-alias: {6,8,10}]
  %s11 = inlined_call_operand.vmem [shape: f32[8,128], index: 11, kind: output, shape index: {}]
  %s12 = sld [smem:[#allocation0]]
  $region75: #{_lambda_.1} parent=0
    _
  %s14 = ssub.s32 1, %s12
  %s15 = scalar_select 0, %s14, %s12
  %s17 = sshll.u32 %s0, 4
  %s18 = int_to_ptr.vmem [resolvable:$true] %s17
  %20 = dma.vmem_to_smem %s18, 16, [#allocation5], [#allocation4]
  %s22 = sshll.u32 %s1, 4
  %s23 = int_to_ptr.vmem [resolvable:$true] %s22
  %25 = dma.vmem_to_smem %s23, 16, [#allocation6], [#allocation4]
  %s27 = sshll.u32 %s2, 4
  %s28 = int_to_ptr.vmem [resolvable:$true] %s27
  %30 = dma.vmem_to_smem %s28, 16, [#allocation7], [#allocation4]
  %32 = dma.done [#allocation4], 48
  %33 = sfence
  $region1: #{_lambda_.1} parent=0
    #allocation8 [shape = 'u8[16384]{0}', space=vmem, size = 0x4000, scoped, tag = 'input window, operand 5, single buffered']
    #allocation9 [shape = 's32[1]{0}', space=sflag, size = 0x4, scoped, tag = 'scoped memory for _lambda_.1']
    #allocation10 [shape = 'u8[65536]{0}', space=vmem, size = 0x10000, scoped, tag = 'input window, operand 9, single buffered']
    #allocation11 [shape = 's32[1]{0}', space=sflag, size = 0x4, scoped, tag = 'scoped memory for _lambda_.1']
    %34 = vsyncpa [#allocation9], 0
    %35 = vsyncpa [#allocation11], 0
    // Predicated region
    $region2: #{_lambda_.1} parent=1 // pred_check
      _
    $region3: #{_lambda_.1} parent=1 // pred_check_branch
      %37 = sbr.rel (0) target = $region5
    $region4: #{_lambda_.1} parent=1 // pred_region
      _
    $region5: #{_lambda_.1} parent=1 // pred_fallthru
      _
    // Predicated region
    $region6: #{_lambda_.1} parent=1 // pred_check
      _
    $region7: #{_lambda_.1} parent=1 // pred_check_branch
      %39 = sbr.rel (0) target = $region9
    $region8: #{_lambda_.1} parent=1 // pred_region
      %41 = vsyncadd [#allocation9], 0
      %s42 = sshll.u32 %s5, 4
      %s43 = int_to_ptr.hbm [resolvable:$true] %s42
      %s44 = sshll.u32 [#allocation8], 4
      %s45 = int_to_ptr.vmem [resolvable:$true] %s44
      %50 = dma.hbm_to_vmem [thread:$0]  %s43, 512, %s45, [#allocation9], 128, 128, 8
    $region9: #{_lambda_.1} parent=1 // pred_fallthru
      _
    // Predicated region
    $region10: #{_lambda_.1} parent=1 // pred_check
      _
    $region11: #{_lambda_.1} parent=1 // pred_check_branch
      %52 = sbr.rel (0) target = $region13
    $region12: #{_lambda_.1} parent=1 // pred_region
      _
    $region13: #{_lambda_.1} parent=1 // pred_fallthru
      _
    // Predicated region
    $region14: #{_lambda_.1} parent=1 // pred_check
      _
    $region15: #{_lambda_.1} parent=1 // pred_check_branch
      %54 = sbr.rel (0) target = $region17
    $region16: #{_lambda_.1} parent=1 // pred_region
      _
    $region17: #{_lambda_.1} parent=1 // pred_fallthru
      _
    // Predicated region
    $region18: #{_lambda_.1} parent=1 // pred_check
      _
    $region19: #{_lambda_.1} parent=1 // pred_check_branch
      %56 = sbr.rel (0) target = $region21
    $region20: #{_lambda_.1} parent=1 // pred_region
      _
    $region21: #{_lambda_.1} parent=1 // pred_fallthru
      _
    // Predicated region
    $region22: #{_lambda_.1} parent=1 // pred_check
      _
    $region23: #{_lambda_.1} parent=1 // pred_check_branch
      %58 = sbr.rel (0) target = $region25
    $region24: #{_lambda_.1} parent=1 // pred_region
      %60 = vsyncadd [#allocation11], 0
      %s61 = sshll.u32 %s9, 4
      %s62 = int_to_ptr.hbm [resolvable:$true] %s61
      %s63 = sshll.u32 [#allocation10], 4
      %s64 = int_to_ptr.vmem [resolvable:$true] %s63
      %69 = dma.hbm_to_vmem [thread:$0]  %s62, 2048, %s64, [#allocation11], 128, 128, 8
    $region25: #{_lambda_.1} parent=1 // pred_fallthru
      _
    // Predicated region
    $region26: #{_lambda_.1} parent=1 // pred_check
      _
    $region27: #{_lambda_.1} parent=1 // pred_check_branch
      %71 = sbr.rel (0) target = $region29
    $region28: #{_lambda_.1} parent=1 // pred_region
      _
    $region29: #{_lambda_.1} parent=1 // pred_fallthru
      _
    // Predicated region
    $region30: #{_lambda_.1} parent=1 // pred_check
      _
    $region31: #{_lambda_.1} parent=1 // pred_check_branch
      %73 = sbr.rel (0) target = $region33
    $region32: #{_lambda_.1} parent=1 // pred_region
      %75 = dma.done [#allocation9], 512
    $region33: #{_lambda_.1} parent=1 // pred_fallthru
      _
    // Predicated region
    $region34: #{_lambda_.1} parent=1 // pred_check
      _
    $region35: #{_lambda_.1} parent=1 // pred_check_branch
      %77 = sbr.rel (0) target = $region37
    $region36: #{_lambda_.1} parent=1 // pred_region
      %79 = dma.done [#allocation11], 2048
    $region37: #{_lambda_.1} parent=1 // pred_fallthru
      _
    %s80 = smul.u32 0, 8
    %s81 = sld [smem:[#allocation6 + %s80]]
    %s82 = sadd.s32 %s80, 7
    %s83 = sld [smem:[#allocation7 + %s82]]
    %s84 = ssub.s32 %s83, %s81
    %s85 = sadd.s32 %s84, 127
    %s86 = sshrl.u32 %s85, 7
    %s87 = smul.u32 %s86, 128
    // While loop
    $region38: #{_lambda_.1} parent=1 // loop_pre_header
      _
    $region39: #{_lambda_.1} parent=1 // loop_header
      %s89 = sphi 0, %s91
      %p90 = scmp.ge.s32.totalorder %s89, %s87
    $region40: #{_lambda_.1} parent=1 // loop_header_branch
      %93 = sbr.rel (%p90) target = $region44
    $region41: #{_lambda_.1} parent=1 // loop_body
      %s94 = sand.u32 %s89, 15
      %p95 = scmp.ge.s32.totalorder %s89, 16
      // Predicated region
      $region45: #{_lambda_.1} parent=41 // pred_check
        %p96 = pneg %p95
      $region46: #{_lambda_.1} parent=41 // pred_check_branch
        %98 = sbr.rel (%p96) target = $region48
      $region47: #{_lambda_.1} parent=41 // pred_region
        %s99 = scalar_lea.sflag [#allocation3], %s94
        %s100 = smul.u32 1, 1
        %s101 = sshll.u32 %s100, 4
        %102 = dma.done %s99, %s101
      $region48: #{_lambda_.1} parent=41 // pred_fallthru
        _
      %s103 = sadd.s32 %s81, %s89
      %p104 = scmp.lt.s32.totalorder %s103, 63
      %s105 = scalar_select %p104, %s103, 63
      %s106 = sld [smem:[#allocation5 + %s105]]
      %s107 = scalar_lea.hbm %s4, %s106
      %s108 = scalar_lea.vmem [#allocation2], %s89
      %s109 = scalar_lea.sflag [#allocation3], %s94
      // Predicated region
      $region49: #{_lambda_.1} parent=41 // pred_check
        _
      $region50: #{_lambda_.1} parent=41 // pred_check_branch
        %111 = sbr.rel target = $region52
      $region51: #{_lambda_.1} parent=41 // pred_region
        %112 = sst [smem:[#allocation14]] [#allocation13]
        %113 = sst [smem:[#allocation15]] [#allocation12]
      $region52: #{_lambda_.1} parent=41 // pred_fallthru
        _
      %115 = shalt.err (0)
      %s117 = sshll.u32 %s107, 4
      %s118 = int_to_ptr.hbm [resolvable:$true] %s117
      %s119 = sshll.u32 %s108, 4
      %s120 = int_to_ptr.vmem [resolvable:$true] %s119
      %122 = dma.hbm_to_vmem [thread:$0]  %s118, 16, %s120, %s109
    $region42: #{_lambda_.1} parent=1 // loop_footer
      %s91 = sadd.s32 %s89, 1
    $region43: #{_lambda_.1} parent=1 // loop_footer_branch
      %88 = sbr.rel target = $region39
    $region44: #{_lambda_.1} parent=1 // loop_exit
      _
    %p123 = scmp.lt.s32.totalorder %s87, 16
    %s124 = scalar_select %p123, %s87, 16
    // While loop
    $region53: #{_lambda_.1} parent=1 // loop_pre_header
      _
    $region54: #{_lambda_.1} parent=1 // loop_header
      %s126 = sphi 0, %s128
      %p127 = scmp.ge.s32.totalorder %s126, %s124
    $region55: #{_lambda_.1} parent=1 // loop_header_branch
      %130 = sbr.rel (%p127) target = $region59
    $region56: #{_lambda_.1} parent=1 // loop_body
      %s131 = scalar_lea.sflag [#allocation3], %s126
      %s132 = smul.u32 1, 1
      %s133 = sshll.u32 %s132, 4
      %134 = dma.done %s131, %s133
    $region57: #{_lambda_.1} parent=1 // loop_footer
      %s128 = sadd.s32 %s126, 1
    $region58: #{_lambda_.1} parent=1 // loop_footer_branch
      %125 = sbr.rel target = $region54
    $region59: #{_lambda_.1} parent=1 // loop_exit
      _
    %v135 = vld [vmem:[%s3] sm:$0xff]
    %v136 = vcvt.f32.s32.to.zero.pseudo %v135
    %138 = vset.pattern.permute.xlu0 2
    %139 = vperm.xlu0 %138, %v135
    %v140 = vpop.permute.xlu0 %139
    %v142 = vlaneseq
    %v143 = vand.u32 %v142, 127
    // While loop
    $region60: #{_lambda_.1} parent=1 // loop_pre_header
      _
    $region61: #{_lambda_.1} parent=1 // loop_header
      %s145 = sphi 0, %s147
      %p146 = scmp.ge.s32.totalorder %s145, %s86
      %v150 = vphi 0.0, %v202
    $region62: #{_lambda_.1} parent=1 // loop_header_branch
      %149 = sbr.rel (%p146) target = $region66
    $region63: #{_lambda_.1} parent=1 // loop_body
      %s151 = smul.u32 %s145, 128
      %s152 = sadd.s32 %s81, %s151
      %v153 = vstv %s152
      %v154 = vadd.s32 %v143, %v153
      %155 = vset.pattern.permute.xlu0 0
      %156 = vperm.xlu0 %155, %v136
      %v157 = vpop.permute.xlu0 %156
      %vm158 = vcmp.ge.s32.totalorder %v154, %v157
      %159 = vset.pattern.permute.xlu0 1
      %160 = vperm.xlu0 %159, %v136
      %v161 = vpop.permute.xlu0 %160
      %vm162 = vcmp.lt.s32.totalorder %v154, %v161
      %vm163 = vmand %vm158, %vm162
      %v164 = vsel %vm163, %v140, 0.0
      %s165 = scalar_lea.vmem [#allocation2], %s151
      %v166 = vld [vmem:[%s165] sm:$0xff]
      %v167 = vld [vmem:[%s165 + $0x8] sm:$0xff]
      %v168 = vld [vmem:[%s165 + $0x10] sm:$0xff]
      %v169 = vld [vmem:[%s165 + $0x18] sm:$0xff]
      %v170 = vld [vmem:[%s165 + $0x20] sm:$0xff]
      %v171 = vld [vmem:[%s165 + $0x28] sm:$0xff]
      %v172 = vld [vmem:[%s165 + $0x30] sm:$0xff]
      %v173 = vld [vmem:[%s165 + $0x38] sm:$0xff]
      %v174 = vld [vmem:[%s165 + $0x40] sm:$0xff]
      %v175 = vld [vmem:[%s165 + $0x48] sm:$0xff]
      %v176 = vld [vmem:[%s165 + $0x50] sm:$0xff]
      %v177 = vld [vmem:[%s165 + $0x58] sm:$0xff]
      %v178 = vld [vmem:[%s165 + $0x60] sm:$0xff]
      %v179 = vld [vmem:[%s165 + $0x68] sm:$0xff]
      %v180 = vld [vmem:[%s165 + $0x70] sm:$0xff]
      %v181 = vld [vmem:[%s165 + $0x78] sm:$0xff]
      %182 = vmatpush.msra.mxu0 %v181
      %183 = vmatpush.msra.mxu0 %v180
      %184 = vmatpush.msra.mxu0 %v179
      %185 = vmatpush.msra.mxu0 %v178
      %186 = vmatpush.msra.mxu0 %v177
      %187 = vmatpush.msra.mxu0 %v176
      %188 = vmatpush.msra.mxu0 %v175
      %189 = vmatpush.msra.mxu0 %v174
      %190 = vmatpush.msra.mxu0 %v173
      %191 = vmatpush.msra.mxu0 %v172
      %192 = vmatpush.msra.mxu0 %v171
      %193 = vmatpush.msra.mxu0 %v170
      %194 = vmatpush.msra.mxu0 %v169
      %195 = vmatpush.msra.mxu0 %v168
      %196 = vmatpush.msra.mxu0 %v167
      %197 = vmatpush.msra.mxu0 %v166
      %198 = vmatmul.f32.gmra.mxu0 %v164
      %v199 = vpop.f32.mrf.mxu0
      %v200 = vadd.f32 0.0, %v199
      %201 = vdwg.mxu0
      %v202 = vadd.f32 %v150, %v200
    $region64: #{_lambda_.1} parent=1 // loop_footer
      %s147 = sadd.s32 %s145, 1
    $region65: #{_lambda_.1} parent=1 // loop_footer_branch
      %144 = sbr.rel target = $region61
    $region66: #{_lambda_.1} parent=1 // loop_exit
      _
    %v203 = vld [vmem:[#allocation8] sm:$0xff]
    %v204 = vld [vmem:[#allocation8 + $0x8] sm:$0xff]
    %v205 = vld [vmem:[#allocation8 + $0x10] sm:$0xff]
    %v206 = vld [vmem:[#allocation8 + $0x18] sm:$0xff]
    %v207 = vld [vmem:[%s6] sm:$0x1]
    %v209 = vperm.slane %v207, 0
    %vm211 = vcmask 261120
    %v213 = vsel %vm211, %v150, 0
    %215 = vmatpush.msra.mxu0 0.0
    %216 = vmatpush.msra.mxu0 0.0
    %217 = vmatpush.msra.mxu0 0.0
    %218 = vmatpush.msra.mxu0 0.0
    %219 = vmatpush.msra.mxu0 0.0
    %220 = vmatpush.msra.mxu0 0.0
    %221 = vmatpush.msra.mxu0 0.0
    %222 = vmatpush.msra.mxu0 0.0
    %223 = vmatpush.msra.mxu0 0.0
    %224 = vmatpush.msra.mxu0 0.0
    %225 = vmatpush.msra.mxu0 0.0
    %226 = vmatpush.msra.mxu0 0.0
    %227 = vmatpush.msra.mxu0 %v206
    %228 = vmatpush.msra.mxu0 %v205
    %229 = vmatpush.msra.mxu0 %v204
    %230 = vmatpush.msra.mxu0 %v203
    %231 = vmatmul.f32.gmra.mxu0 %v213
    %v232 = vpop.f32.mrf.mxu0
    %v233 = vadd.f32 %v209, %v232
    %234 = vdwg.mxu0
    %v235 = vmax.f32 %v233, 0.0
    %v236 = vld [vmem:[%s7] sm:$0xff]
    %v237 = vld [vmem:[%s7 + $0x8] sm:$0xff]
    %v238 = vld [vmem:[%s7 + $0x10] sm:$0xff]
    %v239 = vld [vmem:[%s7 + $0x18] sm:$0xff]
    %v240 = vld [vmem:[%s7 + $0x20] sm:$0xff]
    %v241 = vld [vmem:[%s7 + $0x28] sm:$0xff]
    %v242 = vld [vmem:[%s7 + $0x30] sm:$0xff]
    %v243 = vld [vmem:[%s7 + $0x38] sm:$0xff]
    %v244 = vld [vmem:[%s7 + $0x40] sm:$0xff]
    %v245 = vld [vmem:[%s7 + $0x48] sm:$0xff]
    %v246 = vld [vmem:[%s7 + $0x50] sm:$0xff]
    %v247 = vld [vmem:[%s7 + $0x58] sm:$0xff]
    %v248 = vld [vmem:[%s7 + $0x60] sm:$0xff]
    %v249 = vld [vmem:[%s7 + $0x68] sm:$0xff]
    %v250 = vld [vmem:[%s7 + $0x70] sm:$0xff]
    %v251 = vld [vmem:[%s7 + $0x78] sm:$0xff]
    %v252 = vld [vmem:[%s8] sm:$0x1]
    %v254 = vperm.slane %v252, 0
    %256 = vmatpush.msra.mxu0 %v251
    %257 = vmatpush.msra.mxu0 %v250
    %258 = vmatpush.msra.mxu0 %v249
    %259 = vmatpush.msra.mxu0 %v248
    %260 = vmatpush.msra.mxu0 %v247
    %261 = vmatpush.msra.mxu0 %v246
    %262 = vmatpush.msra.mxu0 %v245
    %263 = vmatpush.msra.mxu0 %v244
    %264 = vmatpush.msra.mxu0 %v243
    %265 = vmatpush.msra.mxu0 %v242
    %266 = vmatpush.msra.mxu0 %v241
    %267 = vmatpush.msra.mxu0 %v240
    %268 = vmatpush.msra.mxu0 %v239
    %269 = vmatpush.msra.mxu0 %v238
    %270 = vmatpush.msra.mxu0 %v237
    %271 = vmatpush.msra.mxu0 %v236
    %272 = vmatmul.f32.gmra.mxu0 %v235
    %v273 = vpop.f32.mrf.mxu0
    %v274 = vadd.f32 %v254, %v273
    %275 = vdwg.mxu0
    %v276 = vmax.f32 %v274, 0.0
    %v277 = vld [vmem:[#allocation10] sm:$0xff]
    %v278 = vld [vmem:[#allocation10 + $0x8] sm:$0xff]
    %v279 = vld [vmem:[#allocation10 + $0x10] sm:$0xff]
    %v280 = vld [vmem:[#allocation10 + $0x18] sm:$0xff]
    %v281 = vld [vmem:[#allocation10 + $0x20] sm:$0xff]
    %v282 = vld [vmem:[#allocation10 + $0x28] sm:$0xff]
    %v283 = vld [vmem:[#allocation10 + $0x30] sm:$0xff]
    %v284 = vld [vmem:[#allocation10 + $0x38] sm:$0xff]
    %v285 = vld [vmem:[#allocation10 + $0x40] sm:$0xff]
    %v286 = vld [vmem:[#allocation10 + $0x48] sm:$0xff]
    %v287 = vld [vmem:[#allocation10 + $0x50] sm:$0xff]
    %v288 = vld [vmem:[#allocation10 + $0x58] sm:$0xff]
    %v289 = vld [vmem:[#allocation10 + $0x60] sm:$0xff]
    %v290 = vld [vmem:[#allocation10 + $0x68] sm:$0xff]
    %v291 = vld [vmem:[#allocation10 + $0x70] sm:$0xff]
    %v292 = vld [vmem:[#allocation10 + $0x78] sm:$0xff]
    %v293 = vld [vmem:[%s10] sm:$0x1]
    %v295 = vperm.slane %v293, 0
    %297 = vmatpush.msra.mxu0 %v292
    %298 = vmatpush.msra.mxu0 %v291
    %299 = vmatpush.msra.mxu0 %v290
    %300 = vmatpush.msra.mxu0 %v289
    %301 = vmatpush.msra.mxu0 %v288
    %302 = vmatpush.msra.mxu0 %v287
    %303 = vmatpush.msra.mxu0 %v286
    %304 = vmatpush.msra.mxu0 %v285
    %305 = vmatpush.msra.mxu0 %v284
    %306 = vmatpush.msra.mxu0 %v283
    %307 = vmatpush.msra.mxu0 %v282
    %308 = vmatpush.msra.mxu0 %v281
    %309 = vmatpush.msra.mxu0 %v280
    %310 = vmatpush.msra.mxu0 %v279
    %311 = vmatpush.msra.mxu0 %v278
    %312 = vmatpush.msra.mxu0 %v277
    %313 = vmatmul.f32.gmra.mxu0 %v276
    %v314 = vpop.f32.mrf.mxu0
    %v315 = vadd.f32 %v295, %v314
    %316 = vdwg.mxu0
    %317 = vst [vmem:[%s11] sm:$0xff] %v315
    // Predicated region
    $region67: #{_lambda_.1} parent=1 // pred_check
      _
    $region68: #{_lambda_.1} parent=1 // pred_check_branch
      %319 = sbr.rel (0) target = $region70
    $region69: #{_lambda_.1} parent=1 // pred_region
      _
    $region70: #{_lambda_.1} parent=1 // pred_fallthru
      _
    // Predicated region
    $region71: #{_lambda_.1} parent=1 // pred_check
      _
    $region72: #{_lambda_.1} parent=1 // pred_check_branch
      %321 = sbr.rel (0) target = $region74
    $region73: #{_lambda_.1} parent=1 // pred_region
      _
    $region74: #{_lambda_.1} parent=1 // pred_fallthru
      _
    %322 = vsyncpa [#allocation9], 1
    %323 = vsyncpa [#allocation11], 1
  %324 = vsyncmov [#allocation3]
  %s325 = vpop.sfrf %324
  %p326 = scmp.eq.s32.totalorder %s325, 0
  %p327 = pneg %p326
  %329 = shalt.err (%p327)
  %s330 = scalar_lea.sflag [#allocation3], 1
  %331 = vsyncmov %s330
  %s332 = vpop.sfrf %331
  %p333 = scmp.eq.s32.totalorder %s332, 0
  %p334 = pneg %p333
  %336 = shalt.err (%p334)
  %s337 = scalar_lea.sflag [#allocation3], 2
  %338 = vsyncmov %s337
  %s339 = vpop.sfrf %338
  %p340 = scmp.eq.s32.totalorder %s339, 0
  %p341 = pneg %p340
  %343 = shalt.err (%p341)
  %s344 = scalar_lea.sflag [#allocation3], 3
  %345 = vsyncmov %s344
  %s346 = vpop.sfrf %345
  %p347 = scmp.eq.s32.totalorder %s346, 0
  %p348 = pneg %p347
  %350 = shalt.err (%p348)
  %s351 = scalar_lea.sflag [#allocation3], 4
  %352 = vsyncmov %s351
  %s353 = vpop.sfrf %352
  %p354 = scmp.eq.s32.totalorder %s353, 0
  %p355 = pneg %p354
  %357 = shalt.err (%p355)
  %s358 = scalar_lea.sflag [#allocation3], 5
  %359 = vsyncmov %s358
  %s360 = vpop.sfrf %359
  %p361 = scmp.eq.s32.totalorder %s360, 0
  %p362 = pneg %p361
  %364 = shalt.err (%p362)
  %s365 = scalar_lea.sflag [#allocation3], 6
  %366 = vsyncmov %s365
  %s367 = vpop.sfrf %366
  %p368 = scmp.eq.s32.totalorder %s367, 0
  %p369 = pneg %p368
  %371 = shalt.err (%p369)
  %s372 = scalar_lea.sflag [#allocation3], 7
  %373 = vsyncmov %s372
  %s374 = vpop.sfrf %373
  %p375 = scmp.eq.s32.totalorder %s374, 0
  %p376 = pneg %p375
  %378 = shalt.err (%p376)
  %s379 = scalar_lea.sflag [#allocation3], 8
  %380 = vsyncmov %s379
  %s381 = vpop.sfrf %380
  %p382 = scmp.eq.s32.totalorder %s381, 0
  %p383 = pneg %p382
  %385 = shalt.err (%p383)
  %s386 = scalar_lea.sflag [#allocation3], 9
  %387 = vsyncmov %s386
  %s388 = vpop.sfrf %387
  %p389 = scmp.eq.s32.totalorder %s388, 0
  %p390 = pneg %p389
  %392 = shalt.err (%p390)
  %s393 = scalar_lea.sflag [#allocation3], 10
  %394 = vsyncmov %s393
  %s395 = vpop.sfrf %394
  %p396 = scmp.eq.s32.totalorder %s395, 0
  %p397 = pneg %p396
  %399 = shalt.err (%p397)
  %s400 = scalar_lea.sflag [#allocation3], 11
  %401 = vsyncmov %s400
  %s402 = vpop.sfrf %401
  %p403 = scmp.eq.s32.totalorder %s402, 0
  %p404 = pneg %p403
  %406 = shalt.err (%p404)
  %s407 = scalar_lea.sflag [#allocation3], 12
  %408 = vsyncmov %s407
  %s409 = vpop.sfrf %408
  %p410 = scmp.eq.s32.totalorder %s409, 0
  %p411 = pneg %p410
  %413 = shalt.err (%p411)
  %s414 = scalar_lea.sflag [#allocation3], 13
  %415 = vsyncmov %s414
  %s416 = vpop.sfrf %415
  %p417 = scmp.eq.s32.totalorder %s416, 0
  %p418 = pneg %p417
  %420 = shalt.err (%p418)
  %s421 = scalar_lea.sflag [#allocation3], 14
  %422 = vsyncmov %s421
  %s423 = vpop.sfrf %422
  %p424 = scmp.eq.s32.totalorder %s423, 0
  %p425 = pneg %p424
  %427 = shalt.err (%p425)
  %s428 = scalar_lea.sflag [#allocation3], 15
  %429 = vsyncmov %s428
  %s430 = vpop.sfrf %429
  %p431 = scmp.eq.s32.totalorder %s430, 0
  %p432 = pneg %p431
  %434 = shalt.err (%p432)

</llo_original>
